<compile_context>
chip_gen: v6e
topology: v6e:2x2x1
jax: 0.10.0
libtpu: 0.0.40
codegen_flags: <defaults>
</compile_context>

<pallas_src>
import functools

import jax
import jax.numpy as jnp
from jax import lax
from jax.experimental import pallas as pl
from jax.experimental.pallas import tpu as pltpu


def _make_mgr_loss_kernel(lambda_div):
    def mgr_loss_kernel(logits_ref, labels_ref, hu_ref, hm_ref, out_ref):
        # ---------- CrossEntropyLoss (mean reduction) ----------
        logits = logits_ref[...].astype(jnp.float32)          # [B, C]
        labels = labels_ref[...]                               # [B, 1] int32
        b, c = logits.shape
        row_max = jnp.max(logits, axis=1, keepdims=True)       # [B, 1]
        shifted = logits - row_max
        lse = jnp.log(jnp.sum(jnp.exp(shifted), axis=1, keepdims=True)) + row_max
        col_idx = lax.broadcasted_iota(jnp.int32, (b, c), 1)
        onehot = (col_idx == labels).astype(jnp.float32)       # [B, C]
        picked = jnp.sum(logits * onehot, axis=1, keepdims=True)
        l_task = jnp.mean(lse - picked)

        # ---------- per-modality pairwise Euclidean distances ([B,B] each) ----------
        def pdist(x_ref):
            x = x_ref[...]                                     # [B, d], input dtype (bf16 ok)
            # Gram in input dtype on the MXU, f32 accumulation.
            gram = lax.dot_general(
                x, x, (((1,), (1,)), ((), ())),
                preferred_element_type=jnp.float32)            # [B, B]
            xf = x.astype(jnp.float32)
            xsq = xf * xf                                      # [B, d]
            sq_col = jnp.sum(xsq, axis=1, keepdims=True)       # [B, 1] exact squared norms
            ones_row = jnp.ones((1, xsq.shape[1]), jnp.float32)
            # row form via a tiny contraction (see NOTE above).
            sq_row = lax.dot_general(
                ones_row, xsq, (((1,), (1,)), ((), ())),
                preferred_element_type=jnp.float32)            # [1, B]
            d2 = sq_col + sq_row - 2.0 * gram
            return jnp.sqrt(jnp.maximum(d2, 0.0) + 1e-8)       # [B, B]

        a = pdist(hu_ref)                                      # pdist(h_u)
        bm = pdist(hm_ref)                                     # pdist(h_m)

        def double_center(m):
            row_mean = jnp.mean(m, axis=1, keepdims=True)      # [B, 1]
            col_mean = jnp.mean(m, axis=0, keepdims=True)      # [1, B]
            grand = jnp.mean(row_mean)                         # grand mean from row means
            return m - col_mean - row_mean + grand

        A = double_center(a)
        Bc = double_center(bm)

        # Single pass over A / Bc: all three second moments from one read of each.
        inv_n = 1.0 / (A.shape[0] * A.shape[1])
        dcov_xy = jnp.sum(A * Bc) * inv_n
        dcov_xx = jnp.sum(A * A) * inv_n
        dcov_yy = jnp.sum(Bc * Bc) * inv_n
        dcor = dcov_xy * lax.rsqrt(dcov_xx * dcov_yy + 1e-8)
        l_div = 1.0 - dcor

        l_total = l_task + lambda_div * l_div

        # ---------- single lane-dense epilogue store ----------
        lane = lax.broadcasted_iota(jnp.int32, (1, 128), 1)
        out = jnp.where(lane == 0, l_total,
              jnp.where(lane == 1, l_task,
              jnp.where(lane == 2, l_div, 0.0)))
        out_ref[...] = out

    return mgr_loss_kernel


@functools.lru_cache(maxsize=1)
def _vmem_limit_bytes():
    """~75% of the current generation's physical VMEM (v5e/v6e: ~96 MiB, v7x: ~48 MiB)."""
    try:
        cap = int(pltpu.get_tpu_info().vmem_capacity_bytes)
        return (cap * 3) // 4
    except Exception:
        return 48 * 1024 * 1024  # conservative fallback, safe on every generation


def mgr_loss(logits, labels, h_u, h_m, lambda_div=1.0):
    """Pallas implementation of MGRLoss.forward.

    logits: [B, C] float
    labels: [B]    int
    h_u:    [B, d] float (f32 or bf16)
    h_m:    [B, d] float (f32 or bf16)
    Returns (L, {'L_task': scalar, 'L_div': scalar}) as jnp scalars (no host sync).
    """
    B, _ = h_u.shape
    labels2d = labels.astype(jnp.int32).reshape(B, 1)

    kernel = _make_mgr_loss_kernel(float(lambda_div))
    vmem = pl.BlockSpec(memory_space=pltpu.MemorySpace.VMEM)

    out = pl.pallas_call(
        kernel,
        out_shape=jax.ShapeDtypeStruct((1, 128), jnp.float32),
        in_specs=[vmem, vmem, vmem, vmem],
        out_specs=vmem,
        compiler_params=pltpu.CompilerParams(vmem_limit_bytes=_vmem_limit_bytes()),
    )(logits, labels2d, h_u, h_m)

    L = out[0, 0]
    return L, {"L_task": out[0, 1], "L_div": out[0, 2]}


def _reference(logits, labels, h_u, h_m, lambda_div=1.0):
    """Pure-JAX reference mirroring the PyTorch module, for a correctness check."""
    logits = logits.astype(jnp.float32)
    lse = jax.nn.logsumexp(logits, axis=1)
    picked = jnp.take_along_axis(logits, labels[:, None].astype(jnp.int32), axis=1)[:, 0]
    l_task = jnp.mean(lse - picked)

    def pdist(x):
        xsq = jnp.sum(x * x, axis=1, keepdims=True)
        dd = xsq + xsq.T - 2.0 * x @ x.T
        return jnp.sqrt(jnp.maximum(dd, 0.0) + 1e-8)

    a = pdist(h_u.astype(jnp.float32))
    b = pdist(h_m.astype(jnp.float32))
    A = a - a.mean(axis=0) - a.mean(axis=1, keepdims=True) + a.mean()
    B = b - b.mean(axis=0) - b.mean(axis=1, keepdims=True) + b.mean()
    dcov_xy = jnp.mean(A * B)
    dcov_xx = jnp.mean(A * A)
    dcov_yy = jnp.mean(B * B)
    dcor = dcov_xy / jnp.sqrt(dcov_xx * dcov_yy + 1e-8)
    l_div = 1.0 - dcor
    return l_task + lambda_div * l_div, l_task, l_div


if __name__ == "__main__":
    B, C, D = 8, 10, 32
    lambda_div = 1.0

    key = jax.random.PRNGKey(0)
    k1, k2, k3, k4 = jax.random.split(key, 4)
    logits = jax.random.normal(k1, (B, C), dtype=jnp.float32)
    labels = jax.random.randint(k2, (B,), 0, C, dtype=jnp.int32)
    h_u = jax.random.normal(k3, (B, D), dtype=jnp.float32)
    h_m = jax.random.normal(k4, (B, D), dtype=jnp.float32)

    # f32 path + correctness check against pure-JAX reference
    L, aux = mgr_loss(logits, labels, h_u, h_m, lambda_div=lambda_div)
    L = jax.block_until_ready(L)
    L_ref, lt_ref, ld_ref = _reference(logits, labels, h_u, h_m, lambda_div)
    assert jnp.allclose(L, L_ref, atol=1e-4), (L, L_ref)
    assert abs(float(aux["L_task"]) - float(lt_ref)) < 1e-4
    assert abs(float(aux["L_div"]) - float(ld_ref)) < 1e-4

    # bf16 feature path (MXU bf16 operands, f32 accumulation) — looser tolerance
    h_u_b = h_u.astype(jnp.bfloat16)
    h_m_b = h_m.astype(jnp.bfloat16)
    Lb, _ = mgr_loss(logits, labels, h_u_b, h_m_b, lambda_div=lambda_div)
    Lb = jax.block_until_ready(Lb)
    Lb_ref, _, _ = _reference(
        logits, labels, h_u_b.astype(jnp.float32), h_m_b.astype(jnp.float32), lambda_div)
    assert jnp.allclose(Lb, Lb_ref, atol=5e-2), (Lb, Lb_ref)

    print("KERNEL_OK")
</pallas_src>

<mosaic_0001>
module attributes {stable_mosaic.version = 11 : i64} {
  func.func @mgr_loss_kernel(%arg0: memref<8x10xf32, #tpu.memory_space<vmem>>, %arg1: memref<8x1xi32, #tpu.memory_space<vmem>>, %arg2: memref<8x32xf32, #tpu.memory_space<vmem>>, %arg3: memref<8x32xf32, #tpu.memory_space<vmem>>, %arg4: memref<1x128xf32, #tpu.memory_space<vmem>>) attributes {dimension_semantics = [], scalar_prefetch = 0 : i64, scratch_operands = 0 : i64, tpu.core_type = #tpu.core_type<tc>} {
    %c0 = arith.constant 0 : index
    %c0_0 = arith.constant 0 : index
    %0 = vector.load %arg0[%c0, %c0_0] : memref<8x10xf32, #tpu.memory_space<vmem>>, vector<8x10xf32>
    %c0_1 = arith.constant 0 : index
    %c0_2 = arith.constant 0 : index
    %1 = vector.load %arg1[%c0_1, %c0_2] : memref<8x1xi32, #tpu.memory_space<vmem>>, vector<8x1xi32>
    %cst = arith.constant dense<0xFF800000> : vector<8xf32>
    %2 = vector.multi_reduction <maximumf>, %0, %cst [1] : vector<8x10xf32> to vector<8xf32>
    %3 = vector.shape_cast %2 : vector<8xf32> to vector<8x1xf32>
    %4 = vector.broadcast %3 : vector<8x1xf32> to vector<8x10xf32>
    %5 = arith.subf %0, %4 : vector<8x10xf32>
    %6 = math.exp %5 : vector<8x10xf32>
    %cst_3 = arith.constant dense<0.000000e+00> : vector<8xf32>
    %7 = vector.multi_reduction <add>, %6, %cst_3 [1] : vector<8x10xf32> to vector<8xf32>
    %8 = vector.shape_cast %7 : vector<8xf32> to vector<8x1xf32>
    %9 = math.log %8 : vector<8x1xf32>
    %10 = arith.addf %9, %3 : vector<8x1xf32>
    %11 = tpu.iota {dimensions = array<i32: 1>} : vector<8x10xi32>
    %12 = vector.broadcast %1 : vector<8x1xi32> to vector<8x10xi32>
    %13 = arith.cmpi eq, %11, %12 : vector<8x10xi32>
    %14 = arith.extui %13 : vector<8x10xi1> to vector<8x10xi32>
    %15 = arith.sitofp %14 : vector<8x10xi32> to vector<8x10xf32>
    %16 = arith.mulf %0, %15 : vector<8x10xf32>
    %cst_4 = arith.constant dense<0.000000e+00> : vector<8xf32>
    %17 = vector.multi_reduction <add>, %16, %cst_4 [1] : vector<8x10xf32> to vector<8xf32>
    %18 = vector.shape_cast %17 : vector<8xf32> to vector<8x1xf32>
    %19 = arith.subf %10, %18 : vector<8x1xf32>
    %20 = vector.shape_cast %19 : vector<8x1xf32> to vector<1x8x1xf32>
    %cst_5 = arith.constant dense<0.000000e+00> : vector<1xf32>
    %21 = vector.multi_reduction <add>, %20, %cst_5 [1, 2] : vector<1x8x1xf32> to vector<1xf32>
    %22 = vector.shape_cast %21 : vector<1xf32> to vector<1x1x1xf32>
    %23 = vector.extract %22[0, 0, 0] : f32 from vector<1x1x1xf32>
    %cst_6 = arith.constant 8.000000e+00 : f32
    %24 = arith.divf %23, %cst_6 : f32
    %c0_7 = arith.constant 0 : index
    %c0_8 = arith.constant 0 : index
    %25 = vector.load %arg2[%c0_7, %c0_8] : memref<8x32xf32, #tpu.memory_space<vmem>>, vector<8x32xf32>
    %cst_9 = arith.constant dense<0.000000e+00> : vector<8x8xf32>
    %26 = tpu.matmul %25, %25, %cst_9 {dimension_numbers = #tpu.dot_dimension_numbers<[1], [1], [0], [0], [0, 0, 1, 0], [], []>} : vector<8x32xf32>, vector<8x32xf32>, vector<8x8xf32> -> vector<8x8xf32>
    %27 = arith.mulf %25, %25 : vector<8x32xf32>
    %cst_10 = arith.constant dense<0.000000e+00> : vector<8xf32>
    %28 = vector.multi_reduction <add>, %27, %cst_10 [1] : vector<8x32xf32> to vector<8xf32>
    %29 = vector.shape_cast %28 : vector<8xf32> to vector<8x1xf32>
    %cst_11 = arith.constant 1.000000e+00 : f32
    %30 = vector.broadcast %cst_11 : f32 to vector<1x32xf32>
    %cst_12 = arith.constant dense<0.000000e+00> : vector<1x8xf32>
    %31 = tpu.matmul %30, %27, %cst_12 {dimension_numbers = #tpu.dot_dimension_numbers<[1], [1], [0], [0], [0, 0, 1, 0], [], []>} : vector<1x32xf32>, vector<8x32xf32>, vector<1x8xf32> -> vector<1x8xf32>
    %32 = vector.broadcast %29 : vector<8x1xf32> to vector<8x8xf32>
    %33 = vector.broadcast %31 : vector<1x8xf32> to vector<8x8xf32>
    %34 = arith.addf %32, %33 : vector<8x8xf32>
    %cst_13 = arith.constant 2.000000e+00 : f32
    %35 = vector.broadcast %cst_13 : f32 to vector<8x8xf32>
    %36 = arith.mulf %35, %26 : vector<8x8xf32>
    %37 = arith.subf %34, %36 : vector<8x8xf32>
    %cst_14 = arith.constant 0.000000e+00 : f32
    %38 = vector.broadcast %cst_14 : f32 to vector<8x8xf32>
    %39 = arith.maximumf %37, %38 : vector<8x8xf32>
    %cst_15 = arith.constant 9.99999993E-9 : f32
    %40 = vector.broadcast %cst_15 : f32 to vector<8x8xf32>
    %41 = arith.addf %39, %40 : vector<8x8xf32>
    %42 = math.sqrt %41 : vector<8x8xf32>
    %c0_16 = arith.constant 0 : index
    %c0_17 = arith.constant 0 : index
    %43 = vector.load %arg3[%c0_16, %c0_17] : memref<8x32xf32, #tpu.memory_space<vmem>>, vector<8x32xf32>
    %cst_18 = arith.constant dense<0.000000e+00> : vector<8x8xf32>
    %44 = tpu.matmul %43, %43, %cst_18 {dimension_numbers = #tpu.dot_dimension_numbers<[1], [1], [0], [0], [0, 0, 1, 0], [], []>} : vector<8x32xf32>, vector<8x32xf32>, vector<8x8xf32> -> vector<8x8xf32>
    %45 = arith.mulf %43, %43 : vector<8x32xf32>
    %cst_19 = arith.constant dense<0.000000e+00> : vector<8xf32>
    %46 = vector.multi_reduction <add>, %45, %cst_19 [1] : vector<8x32xf32> to vector<8xf32>
    %47 = vector.shape_cast %46 : vector<8xf32> to vector<8x1xf32>
    %cst_20 = arith.constant 1.000000e+00 : f32
    %48 = vector.broadcast %cst_20 : f32 to vector<1x32xf32>
    %cst_21 = arith.constant dense<0.000000e+00> : vector<1x8xf32>
    %49 = tpu.matmul %48, %45, %cst_21 {dimension_numbers = #tpu.dot_dimension_numbers<[1], [1], [0], [0], [0, 0, 1, 0], [], []>} : vector<1x32xf32>, vector<8x32xf32>, vector<1x8xf32> -> vector<1x8xf32>
    %50 = vector.broadcast %47 : vector<8x1xf32> to vector<8x8xf32>
    %51 = vector.broadcast %49 : vector<1x8xf32> to vector<8x8xf32>
    %52 = arith.addf %50, %51 : vector<8x8xf32>
    %cst_22 = arith.constant 2.000000e+00 : f32
    %53 = vector.broadcast %cst_22 : f32 to vector<8x8xf32>
    %54 = arith.mulf %53, %44 : vector<8x8xf32>
    %55 = arith.subf %52, %54 : vector<8x8xf32>
    %cst_23 = arith.constant 0.000000e+00 : f32
    %56 = vector.broadcast %cst_23 : f32 to vector<8x8xf32>
    %57 = arith.maximumf %55, %56 : vector<8x8xf32>
    %cst_24 = arith.constant 9.99999993E-9 : f32
    %58 = vector.broadcast %cst_24 : f32 to vector<8x8xf32>
    %59 = arith.addf %57, %58 : vector<8x8xf32>
    %60 = math.sqrt %59 : vector<8x8xf32>
    %cst_25 = arith.constant dense<0.000000e+00> : vector<8xf32>
    %61 = vector.multi_reduction <add>, %42, %cst_25 [1] : vector<8x8xf32> to vector<8xf32>
    %62 = vector.shape_cast %61 : vector<8xf32> to vector<8x1xf32>
    %cst_26 = arith.constant 8.000000e+00 : f32
    %63 = vector.broadcast %cst_26 : f32 to vector<8x1xf32>
    %64 = arith.divf %62, %63 : vector<8x1xf32>
    %cst_27 = arith.constant dense<0.000000e+00> : vector<8xf32>
    %65 = vector.multi_reduction <add>, %42, %cst_27 [0] : vector<8x8xf32> to vector<8xf32>
    %66 = vector.shape_cast %65 : vector<8xf32> to vector<1x8xf32>
    %cst_28 = arith.constant 8.000000e+00 : f32
    %67 = vector.broadcast %cst_28 : f32 to vector<1x8xf32>
    %68 = arith.divf %66, %67 : vector<1x8xf32>
    %69 = vector.shape_cast %64 : vector<8x1xf32> to vector<1x8x1xf32>
    %cst_29 = arith.constant dense<0.000000e+00> : vector<1xf32>
    %70 = vector.multi_reduction <add>, %69, %cst_29 [1, 2] : vector<1x8x1xf32> to vector<1xf32>
    %71 = vector.shape_cast %70 : vector<1xf32> to vector<1x1x1xf32>
    %72 = vector.extract %71[0, 0, 0] : f32 from vector<1x1x1xf32>
    %cst_30 = arith.constant 8.000000e+00 : f32
    %73 = arith.divf %72, %cst_30 : f32
    %74 = vector.broadcast %68 : vector<1x8xf32> to vector<8x8xf32>
    %75 = arith.subf %42, %74 : vector<8x8xf32>
    %76 = vector.broadcast %64 : vector<8x1xf32> to vector<8x8xf32>
    %77 = arith.subf %75, %76 : vector<8x8xf32>
    %78 = vector.broadcast %73 : f32 to vector<8x8xf32>
    %79 = arith.addf %77, %78 : vector<8x8xf32>
    %cst_31 = arith.constant dense<0.000000e+00> : vector<8xf32>
    %80 = vector.multi_reduction <add>, %60, %cst_31 [1] : vector<8x8xf32> to vector<8xf32>
    %81 = vector.shape_cast %80 : vector<8xf32> to vector<8x1xf32>
    %cst_32 = arith.constant 8.000000e+00 : f32
    %82 = vector.broadcast %cst_32 : f32 to vector<8x1xf32>
    %83 = arith.divf %81, %82 : vector<8x1xf32>
    %cst_33 = arith.constant dense<0.000000e+00> : vector<8xf32>
    %84 = vector.multi_reduction <add>, %60, %cst_33 [0] : vector<8x8xf32> to vector<8xf32>
    %85 = vector.shape_cast %84 : vector<8xf32> to vector<1x8xf32>
    %cst_34 = arith.constant 8.000000e+00 : f32
    %86 = vector.broadcast %cst_34 : f32 to vector<1x8xf32>
    %87 = arith.divf %85, %86 : vector<1x8xf32>
    %88 = vector.shape_cast %83 : vector<8x1xf32> to vector<1x8x1xf32>
    %cst_35 = arith.constant dense<0.000000e+00> : vector<1xf32>
    %89 = vector.multi_reduction <add>, %88, %cst_35 [1, 2] : vector<1x8x1xf32> to vector<1xf32>
    %90 = vector.shape_cast %89 : vector<1xf32> to vector<1x1x1xf32>
    %91 = vector.extract %90[0, 0, 0] : f32 from vector<1x1x1xf32>
    %cst_36 = arith.constant 8.000000e+00 : f32
    %92 = arith.divf %91, %cst_36 : f32
    %93 = vector.broadcast %87 : vector<1x8xf32> to vector<8x8xf32>
    %94 = arith.subf %60, %93 : vector<8x8xf32>
    %95 = vector.broadcast %83 : vector<8x1xf32> to vector<8x8xf32>
    %96 = arith.subf %94, %95 : vector<8x8xf32>
    %97 = vector.broadcast %92 : f32 to vector<8x8xf32>
    %98 = arith.addf %96, %97 : vector<8x8xf32>
    %99 = arith.mulf %79, %98 : vector<8x8xf32>
    %100 = vector.shape_cast %99 : vector<8x8xf32> to vector<1x8x8xf32>
    %cst_37 = arith.constant dense<0.000000e+00> : vector<1xf32>
    %101 = vector.multi_reduction <add>, %100, %cst_37 [1, 2] : vector<1x8x8xf32> to vector<1xf32>
    %102 = vector.shape_cast %101 : vector<1xf32> to vector<1x1x1xf32>
    %103 = vector.extract %102[0, 0, 0] : f32 from vector<1x1x1xf32>
    %cst_38 = arith.constant 1.562500e-02 : f32
    %104 = arith.mulf %103, %cst_38 : f32
    %105 = arith.mulf %79, %79 : vector<8x8xf32>
    %106 = vector.shape_cast %105 : vector<8x8xf32> to vector<1x8x8xf32>
    %cst_39 = arith.constant dense<0.000000e+00> : vector<1xf32>
    %107 = vector.multi_reduction <add>, %106, %cst_39 [1, 2] : vector<1x8x8xf32> to vector<1xf32>
    %108 = vector.shape_cast %107 : vector<1xf32> to vector<1x1x1xf32>
    %109 = vector.extract %108[0, 0, 0] : f32 from vector<1x1x1xf32>
    %cst_40 = arith.constant 1.562500e-02 : f32
    %110 = arith.mulf %109, %cst_40 : f32
    %111 = arith.mulf %98, %98 : vector<8x8xf32>
    %112 = vector.shape_cast %111 : vector<8x8xf32> to vector<1x8x8xf32>
    %cst_41 = arith.constant dense<0.000000e+00> : vector<1xf32>
    %113 = vector.multi_reduction <add>, %112, %cst_41 [1, 2] : vector<1x8x8xf32> to vector<1xf32>
    %114 = vector.shape_cast %113 : vector<1xf32> to vector<1x1x1xf32>
    %115 = vector.extract %114[0, 0, 0] : f32 from vector<1x1x1xf32>
    %cst_42 = arith.constant 1.562500e-02 : f32
    %116 = arith.mulf %115, %cst_42 : f32
    %117 = arith.mulf %110, %116 : f32
    %cst_43 = arith.constant 9.99999993E-9 : f32
    %118 = arith.addf %117, %cst_43 : f32
    %119 = math.rsqrt %118 : f32
    %120 = arith.mulf %104, %119 : f32
    %cst_44 = arith.constant 1.000000e+00 : f32
    %121 = arith.subf %cst_44, %120 : f32
    %cst_45 = arith.constant 1.000000e+00 : f32
    %122 = arith.mulf %cst_45, %121 : f32
    %123 = arith.addf %24, %122 : f32
    %124 = tpu.iota {dimensions = array<i32: 1>} : vector<1x128xi32>
    %c0_i32 = arith.constant 0 : i32
    %125 = vector.broadcast %c0_i32 : i32 to vector<1x128xi32>
    %126 = arith.cmpi eq, %124, %125 : vector<1x128xi32>
    %c1_i32 = arith.constant 1 : i32
    %127 = vector.broadcast %c1_i32 : i32 to vector<1x128xi32>
    %128 = arith.cmpi eq, %124, %127 : vector<1x128xi32>
    %c2_i32 = arith.constant 2 : i32
    %129 = vector.broadcast %c2_i32 : i32 to vector<1x128xi32>
    %130 = arith.cmpi eq, %124, %129 : vector<1x128xi32>
    %cst_46 = arith.constant 0.000000e+00 : f32
    %131 = vector.broadcast %121 : f32 to vector<1x128xf32>
    %132 = vector.broadcast %cst_46 : f32 to vector<1x128xf32>
    %133 = arith.select %130, %131, %132 : vector<1x128xi1>, vector<1x128xf32>
    %134 = vector.broadcast %24 : f32 to vector<1x128xf32>
    %135 = arith.select %128, %134, %133 : vector<1x128xi1>, vector<1x128xf32>
    %136 = vector.broadcast %123 : f32 to vector<1x128xf32>
    %137 = arith.select %126, %136, %135 : vector<1x128xi1>, vector<1x128xf32>
    %c0_47 = arith.constant 0 : index
    %c0_48 = arith.constant 0 : index
    %138 = vector.load %arg4[%c0_47, %c0_48] : memref<1x128xf32, #tpu.memory_space<vmem>>, vector<1x128xf32>
    tpu.vector_store %arg4[%c0_47, %c0_48], %137 {strides = array<i32>} : memref<1x128xf32, #tpu.memory_space<vmem>>, vector<1x128xf32>,
    return
  }
}

</mosaic_0001>

<llo_original>
// kernel: tpu_custom_call.1
$region0: #{tpu_custom_call.1}
  #allocation0 [shape = 'u32[]', space=smem, size = 0x4, offset = 0x4, fixed_abs, tag = 'smem constant byte address 0x4 - core index']
  #allocation1 [shape = 'u32[144,128]{1,0:T(1,128)}', space=vmem, size = 0x12000, scoped, tag = 'internal scratch']
  %s0 = inlined_call_operand.vmem [shape: f32[8,10], index: 0, kind: input, shape index: {}]
  %s1 = inlined_call_operand.vmem [shape: s32[8,1], index: 1, kind: input, shape index: {}]
  %s2 = inlined_call_operand.hbm [shape: f32[8,32], index: 2, kind: input, shape index: {}]
  %s3 = inlined_call_operand.hbm [shape: f32[8,32], index: 3, kind: input, shape index: {}]
  %s4 = inlined_call_operand.hbm [shape: f32[1,128], index: 4, kind: output, shape index: {}]
  %s5 = sld [smem:[#allocation0]]
  $region34: #{tpu_custom_call.1} parent=0
    _
  %s7 = ssub.s32 1, %s5
  %s8 = scalar_select 0, %s7, %s5
  $region1: #{tpu_custom_call.1} parent=0
    #allocation2 [shape = 'u8[4096]{0}', space=vmem, size = 0x1000, scoped, tag = 'input window, operand 2, single buffered']
    #allocation3 [shape = 's32[1]{0}', space=sflag, size = 0x4, scoped, tag = 'scoped memory for tpu_custom_call.1']
    #allocation4 [shape = 's32[1]{0}', space=sflag, size = 0x4, scoped, tag = 'scoped memory for tpu_custom_call.1']
    #allocation5 [shape = 'u8[4096]{0}', space=vmem, size = 0x1000, scoped, tag = 'input window, operand 3, single buffered']
    #allocation6 [shape = 's32[1]{0}', space=sflag, size = 0x4, scoped, tag = 'scoped memory for tpu_custom_call.1']
    #allocation7 [shape = 'u8[512]{0}', space=vmem, size = 0x400, scoped, tag = 'output window, operand 0, single buffered']
    %9 = vsyncpa [#allocation3], 0
    %10 = vsyncpa [#allocation6], 0
    %11 = vsyncpa [#allocation4], 0
    // Predicated region
    $region2: #{tpu_custom_call.1} parent=1 // pred_check
      _
    $region3: #{tpu_custom_call.1} parent=1 // pred_check_branch
      %13 = sbr.rel (0) target = $region5
    $region4: #{tpu_custom_call.1} parent=1 // pred_region
      _
    $region5: #{tpu_custom_call.1} parent=1 // pred_fallthru
      _
    // Predicated region
    $region6: #{tpu_custom_call.1} parent=1 // pred_check
      _
    $region7: #{tpu_custom_call.1} parent=1 // pred_check_branch
      %15 = sbr.rel (0) target = $region9
    $region8: #{tpu_custom_call.1} parent=1 // pred_region
      _
    $region9: #{tpu_custom_call.1} parent=1 // pred_fallthru
      _
    // Predicated region
    $region10: #{tpu_custom_call.1} parent=1 // pred_check
      _
    $region11: #{tpu_custom_call.1} parent=1 // pred_check_branch
      %17 = sbr.rel (0) target = $region13
    $region12: #{tpu_custom_call.1} parent=1 // pred_region
      %s19 = ssub.s32 128, 128
      %20 = vsyncadd [#allocation3], %s19
      %s22 = sshll.u32 [#allocation2], 4
      %s23 = int_to_ptr.vmem [resolvable:$true] %s22
      %25 = dma.hbm_to_vmem [thread:$0]  %s2, 128, %s23, [#allocation3]
    $region13: #{tpu_custom_call.1} parent=1 // pred_fallthru
      _
    // Predicated region
    $region14: #{tpu_custom_call.1} parent=1 // pred_check
      _
    $region15: #{tpu_custom_call.1} parent=1 // pred_check_branch
      %27 = sbr.rel (0) target = $region17
    $region16: #{tpu_custom_call.1} parent=1 // pred_region
      %s29 = ssub.s32 128, 128
      %30 = vsyncadd [#allocation6], %s29
      %s32 = sshll.u32 [#allocation5], 4
      %s33 = int_to_ptr.vmem [resolvable:$true] %s32
      %35 = dma.hbm_to_vmem [thread:$0]  %s3, 128, %s33, [#allocation6]
    $region17: #{tpu_custom_call.1} parent=1 // pred_fallthru
      _
    // Predicated region
    $region18: #{tpu_custom_call.1} parent=1 // pred_check
      _
    $region19: #{tpu_custom_call.1} parent=1 // pred_check_branch
      %37 = sbr.rel (0) target = $region21
    $region20: #{tpu_custom_call.1} parent=1 // pred_region
      %38 = dma.done [#allocation3], 128
    $region21: #{tpu_custom_call.1} parent=1 // pred_fallthru
      _
    // Predicated region
    $region22: #{tpu_custom_call.1} parent=1 // pred_check
      _
    $region23: #{tpu_custom_call.1} parent=1 // pred_check_branch
      %40 = sbr.rel (0) target = $region25
    $region24: #{tpu_custom_call.1} parent=1 // pred_region
      %41 = dma.done [#allocation6], 128
    $region25: #{tpu_custom_call.1} parent=1 // pred_fallthru
      _
    %v42 = vld [vmem:[%s0] sm:$0xff]
    %v43 = vld [vmem:[%s1] sm:$0xff]
    %vm44 = vcmask 80896
    %v45 = vsel %vm44, %v42, -inf
    %46 = vmax.xlane.f32.xlu0 %v45
    %v47 = vpop.xlane.xlu0 %46
    %v48 = vsub.f32 %v42, %v47
    %v49 = vmul.f32 %v48, 1.442695
    %v50 = vpow.pop %v49
    %v51 = vsel %vm44, %v50, 0.0
    %52 = vadd.xlane.f32.xlu0 %v51
    %v53 = vpop.xlane.xlu0 %52
    %v54 = vlog2.pop %v53
    %v55 = vmul.f32 %v54, 0.6931472
    %v56 = vadd.f32 %v55, %v47
    %v57 = vlaneseq
    %v58 = vand.u32 %v57, 127
    %59 = vset.pattern.permute.xlu0 0
    %60 = vperm.xlu0 %59, %v43
    %v61 = vpop.permute.xlu0 %60
    %vm62 = vcmp.eq.s32.totalorder %v58, %v61
    %v63 = vsel %vm62, 1, 0
    %v64 = vcvt.s32.f32 %v63
    %v65 = vmul.f32 %v42, %v64
    %v66 = vsel %vm44, %v65, 0.0
    %67 = vadd.xlane.f32.xlu0 %v66
    %v68 = vpop.xlane.xlu0 %67
    %v69 = vsub.f32 %v56, %v68
    %vm70 = vcmask 7168
    %v71 = vsel %vm70, %v69, 0.0
    %72 = vadd.xlane.f32.xlu0 %v71
    %v73 = vpop.xlane.xlu0 %72
    %v74 = vrot.slane %v73, 4
    %v75 = vadd.f32 %v73, %v74
    %v76 = vrot.slane %v75, 2
    %v77 = vadd.f32 %v75, %v76
    %v78 = vrot.slane %v77, 1
    %v79 = vadd.f32 %v77, %v78
    %s80 = vtos %v79
    %v81 = vrcp.pop 8.0
    %s82 = vtos %v81
    %s83 = smul.f32 %s80, %s82
    %v84 = vld [vmem:[#allocation2] sm:$0xff]
    %vm85 = vcmask 261120
    %v87 = vsel %vm85, %v84, 0
    %89 = vmatprep.subr.mxu0 0.0
    %90 = vmatpush1.xpose.msra.mxu0 0.0
    %91 = vmatprep.subr.mxu0 0.0
    %92 = vmatpush1.xpose.msra.mxu0 0.0
    %93 = vmatprep.subr.mxu0 0.0
    %94 = vmatpush1.xpose.msra.mxu0 0.0
    %95 = vmatprep.subr.mxu0 0.0
    %96 = vmatpush1.xpose.msra.mxu0 0.0
    %97 = vmatprep.subr.mxu0 0.0
    %98 = vmatpush1.xpose.msra.mxu0 0.0
    %99 = vmatprep.subr.mxu0 0.0
    %100 = vmatpush1.xpose.msra.mxu0 0.0
    %101 = vmatprep.subr.mxu0 0.0
    %102 = vmatpush1.xpose.msra.mxu0 0.0
    %103 = vmatprep.subr.mxu0 0.0
    %104 = vmatpush1.xpose.msra.mxu0 0.0
    %105 = vmatprep.subr.mxu0 0.0
    %106 = vmatpush1.xpose.msra.mxu0 0.0
    %107 = vmatprep.subr.mxu0 0.0
    %108 = vmatpush1.xpose.msra.mxu0 0.0
    %109 = vmatprep.subr.mxu0 0.0
    %110 = vmatpush1.xpose.msra.mxu0 0.0
    %111 = vmatprep.subr.mxu0 0.0
    %112 = vmatpush1.xpose.msra.mxu0 0.0
    %113 = vmatprep.subr.mxu0 0.0
    %114 = vmatpush1.xpose.msra.mxu0 0.0
    %115 = vmatprep.subr.mxu0 0.0
    %116 = vmatpush1.xpose.msra.mxu0 0.0
    %117 = vmatprep.subr.mxu0 0.0
    %118 = vmatpush1.xpose.msra.mxu0 0.0
    %119 = vmatprep.subr.mxu0 0.0
    %120 = vmatpush1.xpose.msra.mxu0 %v87
    %121 = vmatprep.subr.mxu0 0.0
    %122 = vmatpush2.xpose.msra.mxu0 0.0
    %123 = vmatprep.subr.mxu0 0.0
    %124 = vmatpush2.xpose.msra.mxu0 0.0
    %125 = vmatprep.subr.mxu0 0.0
    %126 = vmatpush2.xpose.msra.mxu0 0.0
    %127 = vmatprep.subr.mxu0 0.0
    %128 = vmatpush2.xpose.msra.mxu0 0.0
    %129 = vmatprep.subr.mxu0 0.0
    %130 = vmatpush2.xpose.msra.mxu0 0.0
    %131 = vmatprep.subr.mxu0 0.0
    %132 = vmatpush2.xpose.msra.mxu0 0.0
    %133 = vmatprep.subr.mxu0 0.0
    %134 = vmatpush2.xpose.msra.mxu0 0.0
    %135 = vmatprep.subr.mxu0 0.0
    %136 = vmatpush2.xpose.msra.mxu0 0.0
    %137 = vmatprep.subr.mxu0 0.0
    %138 = vmatpush2.xpose.msra.mxu0 0.0
    %139 = vmatprep.subr.mxu0 0.0
    %140 = vmatpush2.xpose.msra.mxu0 0.0
    %141 = vmatprep.subr.mxu0 0.0
    %142 = vmatpush2.xpose.msra.mxu0 0.0
    %143 = vmatprep.subr.mxu0 0.0
    %144 = vmatpush2.xpose.msra.mxu0 0.0
    %145 = vmatprep.subr.mxu0 0.0
    %146 = vmatpush2.xpose.msra.mxu0 0.0
    %147 = vmatprep.subr.mxu0 0.0
    %148 = vmatpush2.xpose.msra.mxu0 0.0
    %149 = vmatprep.subr.mxu0 0.0
    %150 = vmatpush2.xpose.msra.mxu0 0.0
    %151 = vmatprep.subr.mxu0 0.0
    %152 = vmatpush2.xpose.msra.mxu0 0.0
    %153 = vmatprep.mubr.f32.mxu0 0.0
    %154 = vmatmul.mubr.f32.gmra.mxu0 %v87
    %v155 = vpop.f32.mrf.mxu0
    %v156 = vadd.f32 0.0, %v155
    %v157 = vpop.f32.mrf.mxu0
    %158 = vdwg.mxu0
    %v159 = vmul.f32 %v84, %v84
    %v160 = vsel %vm85, %v159, 0.0
    %161 = vadd.xlane.f32.xlu0 %v160
    %v162 = vpop.xlane.xlu0 %161
    %v164 = vsel %vm85, 1.0, 0
    %v167 = vsel %vm85, %v159, 0
    %169 = vmatprep.subr.mxu0 0.0
    %170 = vmatpush1.xpose.msra.mxu0 0.0
    %171 = vmatprep.subr.mxu0 0.0
    %172 = vmatpush1.xpose.msra.mxu0 0.0
    %173 = vmatprep.subr.mxu0 0.0
    %174 = vmatpush1.xpose.msra.mxu0 0.0
    %175 = vmatprep.subr.mxu0 0.0
    %176 = vmatpush1.xpose.msra.mxu0 0.0
    %177 = vmatprep.subr.mxu0 0.0
    %178 = vmatpush1.xpose.msra.mxu0 0.0
    %179 = vmatprep.subr.mxu0 0.0
    %180 = vmatpush1.xpose.msra.mxu0 0.0
    %181 = vmatprep.subr.mxu0 0.0
    %182 = vmatpush1.xpose.msra.mxu0 0.0
    %183 = vmatprep.subr.mxu0 0.0
    %184 = vmatpush1.xpose.msra.mxu0 0.0
    %185 = vmatprep.subr.mxu0 0.0
    %186 = vmatpush1.xpose.msra.mxu0 0.0
    %187 = vmatprep.subr.mxu0 0.0
    %188 = vmatpush1.xpose.msra.mxu0 0.0
    %189 = vmatprep.subr.mxu0 0.0
    %190 = vmatpush1.xpose.msra.mxu0 0.0
    %191 = vmatprep.subr.mxu0 0.0
    %192 = vmatpush1.xpose.msra.mxu0 0.0
    %193 = vmatprep.subr.mxu0 0.0
    %194 = vmatpush1.xpose.msra.mxu0 0.0
    %195 = vmatprep.subr.mxu0 0.0
    %196 = vmatpush1.xpose.msra.mxu0 0.0
    %197 = vmatprep.subr.mxu0 0.0
    %198 = vmatpush1.xpose.msra.mxu0 0.0
    %199 = vmatprep.subr.mxu0 0.0
    %200 = vmatpush1.xpose.msra.mxu0 %v167
    %201 = vmatprep.subr.mxu0 0.0
    %202 = vmatpush2.xpose.msra.mxu0 0.0
    %203 = vmatprep.subr.mxu0 0.0
    %204 = vmatpush2.xpose.msra.mxu0 0.0
    %205 = vmatprep.subr.mxu0 0.0
    %206 = vmatpush2.xpose.msra.mxu0 0.0
    %207 = vmatprep.subr.mxu0 0.0
    %208 = vmatpush2.xpose.msra.mxu0 0.0
    %209 = vmatprep.subr.mxu0 0.0
    %210 = vmatpush2.xpose.msra.mxu0 0.0
    %211 = vmatprep.subr.mxu0 0.0
    %212 = vmatpush2.xpose.msra.mxu0 0.0
    %213 = vmatprep.subr.mxu0 0.0
    %214 = vmatpush2.xpose.msra.mxu0 0.0
    %215 = vmatprep.subr.mxu0 0.0
    %216 = vmatpush2.xpose.msra.mxu0 0.0
    %217 = vmatprep.subr.mxu0 0.0
    %218 = vmatpush2.xpose.msra.mxu0 0.0
    %219 = vmatprep.subr.mxu0 0.0
    %220 = vmatpush2.xpose.msra.mxu0 0.0
    %221 = vmatprep.subr.mxu0 0.0
    %222 = vmatpush2.xpose.msra.mxu0 0.0
    %223 = vmatprep.subr.mxu0 0.0
    %224 = vmatpush2.xpose.msra.mxu0 0.0
    %225 = vmatprep.subr.mxu0 0.0
    %226 = vmatpush2.xpose.msra.mxu0 0.0
    %227 = vmatprep.subr.mxu0 0.0
    %228 = vmatpush2.xpose.msra.mxu0 0.0
    %229 = vmatprep.subr.mxu0 0.0
    %230 = vmatpush2.xpose.msra.mxu0 0.0
    %231 = vmatprep.subr.mxu0 0.0
    %232 = vmatpush2.xpose.msra.mxu0 0.0
    %233 = vmatprep.mubr.f32.mxu0 0.0
    %234 = vmatmul.mubr.f32.gmra.mxu0 %v164
    %v235 = vpop.f32.mrf.mxu0
    %v236 = vadd.f32 0.0, %v235
    %v237 = vpop.f32.mrf.mxu0
    %238 = vdwg.mxu0
    %v239 = vlaneseq
    %v240 = vshrl.u32 %v239, 7
    %v241 = vsub.s32 0, %v240
    %v242 = vrot.slane %v236, %v241
    %v243 = vadd.f32 %v162, %v242
    %v244 = vmul.f32 %v156, 2.0
    %v245 = vsub.f32 %v243, %v244
    %v246 = vmax.f32 %v245, 0.0
    %v247 = vadd.f32 %v246, 1e-08
    %v248 = vrsqrt.pop %v247
    %v249 = vmul.f32 %v247, %v248
    %vm250 = vcmp.eq.f32.partialorder %v247, inf
    %v251 = vsel %vm250, %v247, %v249
    %vm252 = vcmp.eq.f32.partialorder %v247, 0.0
    %v253 = vand.u32 %v247, 2147483648
    %v254 = vsel %vm252, %v253, %v251
    %v255 = vld [vmem:[#allocation5] sm:$0xff]
    %v257 = vsel %vm85, %v255, 0
    %259 = vmatprep.subr.mxu0 0.0
    %260 = vmatpush1.xpose.msra.mxu0 0.0
    %261 = vmatprep.subr.mxu0 0.0
    %262 = vmatpush1.xpose.msra.mxu0 0.0
    %263 = vmatprep.subr.mxu0 0.0
    %264 = vmatpush1.xpose.msra.mxu0 0.0
    %265 = vmatprep.subr.mxu0 0.0
    %266 = vmatpush1.xpose.msra.mxu0 0.0
    %267 = vmatprep.subr.mxu0 0.0
    %268 = vmatpush1.xpose.msra.mxu0 0.0
    %269 = vmatprep.subr.mxu0 0.0
    %270 = vmatpush1.xpose.msra.mxu0 0.0
    %271 = vmatprep.subr.mxu0 0.0
    %272 = vmatpush1.xpose.msra.mxu0 0.0
    %273 = vmatprep.subr.mxu0 0.0
    %274 = vmatpush1.xpose.msra.mxu0 0.0
    %275 = vmatprep.subr.mxu0 0.0
    %276 = vmatpush1.xpose.msra.mxu0 0.0
    %277 = vmatprep.subr.mxu0 0.0
    %278 = vmatpush1.xpose.msra.mxu0 0.0
    %279 = vmatprep.subr.mxu0 0.0
    %280 = vmatpush1.xpose.msra.mxu0 0.0
    %281 = vmatprep.subr.mxu0 0.0
    %282 = vmatpush1.xpose.msra.mxu0 0.0
    %283 = vmatprep.subr.mxu0 0.0
    %284 = vmatpush1.xpose.msra.mxu0 0.0
    %285 = vmatprep.subr.mxu0 0.0
    %286 = vmatpush1.xpose.msra.mxu0 0.0
    %287 = vmatprep.subr.mxu0 0.0
    %288 = vmatpush1.xpose.msra.mxu0 0.0
    %289 = vmatprep.subr.mxu0 0.0
    %290 = vmatpush1.xpose.msra.mxu0 %v257
    %291 = vmatprep.subr.mxu0 0.0
    %292 = vmatpush2.xpose.msra.mxu0 0.0
    %293 = vmatprep.subr.mxu0 0.0
    %294 = vmatpush2.xpose.msra.mxu0 0.0
    %295 = vmatprep.subr.mxu0 0.0
    %296 = vmatpush2.xpose.msra.mxu0 0.0
    %297 = vmatprep.subr.mxu0 0.0
    %298 = vmatpush2.xpose.msra.mxu0 0.0
    %299 = vmatprep.subr.mxu0 0.0
    %300 = vmatpush2.xpose.msra.mxu0 0.0
    %301 = vmatprep.subr.mxu0 0.0
    %302 = vmatpush2.xpose.msra.mxu0 0.0
    %303 = vmatprep.subr.mxu0 0.0
    %304 = vmatpush2.xpose.msra.mxu0 0.0
    %305 = vmatprep.subr.mxu0 0.0
    %306 = vmatpush2.xpose.msra.mxu0 0.0
    %307 = vmatprep.subr.mxu0 0.0
    %308 = vmatpush2.xpose.msra.mxu0 0.0
    %309 = vmatprep.subr.mxu0 0.0
    %310 = vmatpush2.xpose.msra.mxu0 0.0
    %311 = vmatprep.subr.mxu0 0.0
    %312 = vmatpush2.xpose.msra.mxu0 0.0
    %313 = vmatprep.subr.mxu0 0.0
    %314 = vmatpush2.xpose.msra.mxu0 0.0
    %315 = vmatprep.subr.mxu0 0.0
    %316 = vmatpush2.xpose.msra.mxu0 0.0
    %317 = vmatprep.subr.mxu0 0.0
    %318 = vmatpush2.xpose.msra.mxu0 0.0
    %319 = vmatprep.subr.mxu0 0.0
    %320 = vmatpush2.xpose.msra.mxu0 0.0
    %321 = vmatprep.subr.mxu0 0.0
    %322 = vmatpush2.xpose.msra.mxu0 0.0
    %323 = vmatprep.mubr.f32.mxu0 0.0
    %324 = vmatmul.mubr.f32.gmra.mxu0 %v257
    %v325 = vpop.f32.mrf.mxu0
    %v326 = vadd.f32 0.0, %v325
    %v327 = vpop.f32.mrf.mxu0
    %328 = vdwg.mxu0
    %v329 = vmul.f32 %v255, %v255
    %v330 = vsel %vm85, %v329, 0.0
    %331 = vadd.xlane.f32.xlu0 %v330
    %v332 = vpop.xlane.xlu0 %331
    %v334 = vsel %vm85, %v329, 0
    %336 = vmatprep.subr.mxu0 0.0
    %337 = vmatpush1.xpose.msra.mxu0 0.0
    %338 = vmatprep.subr.mxu0 0.0
    %339 = vmatpush1.xpose.msra.mxu0 0.0
    %340 = vmatprep.subr.mxu0 0.0
    %341 = vmatpush1.xpose.msra.mxu0 0.0
    %342 = vmatprep.subr.mxu0 0.0
    %343 = vmatpush1.xpose.msra.mxu0 0.0
    %344 = vmatprep.subr.mxu0 0.0
    %345 = vmatpush1.xpose.msra.mxu0 0.0
    %346 = vmatprep.subr.mxu0 0.0
    %347 = vmatpush1.xpose.msra.mxu0 0.0
    %348 = vmatprep.subr.mxu0 0.0
    %349 = vmatpush1.xpose.msra.mxu0 0.0
    %350 = vmatprep.subr.mxu0 0.0
    %351 = vmatpush1.xpose.msra.mxu0 0.0
    %352 = vmatprep.subr.mxu0 0.0
    %353 = vmatpush1.xpose.msra.mxu0 0.0
    %354 = vmatprep.subr.mxu0 0.0
    %355 = vmatpush1.xpose.msra.mxu0 0.0
    %356 = vmatprep.subr.mxu0 0.0
    %357 = vmatpush1.xpose.msra.mxu0 0.0
    %358 = vmatprep.subr.mxu0 0.0
    %359 = vmatpush1.xpose.msra.mxu0 0.0
    %360 = vmatprep.subr.mxu0 0.0
    %361 = vmatpush1.xpose.msra.mxu0 0.0
    %362 = vmatprep.subr.mxu0 0.0
    %363 = vmatpush1.xpose.msra.mxu0 0.0
    %364 = vmatprep.subr.mxu0 0.0
    %365 = vmatpush1.xpose.msra.mxu0 0.0
    %366 = vmatprep.subr.mxu0 0.0
    %367 = vmatpush1.xpose.msra.mxu0 %v334
    %368 = vmatprep.subr.mxu0 0.0
    %369 = vmatpush2.xpose.msra.mxu0 0.0
    %370 = vmatprep.subr.mxu0 0.0
    %371 = vmatpush2.xpose.msra.mxu0 0.0
    %372 = vmatprep.subr.mxu0 0.0
    %373 = vmatpush2.xpose.msra.mxu0 0.0
    %374 = vmatprep.subr.mxu0 0.0
    %375 = vmatpush2.xpose.msra.mxu0 0.0
    %376 = vmatprep.subr.mxu0 0.0
    %377 = vmatpush2.xpose.msra.mxu0 0.0
    %378 = vmatprep.subr.mxu0 0.0
    %379 = vmatpush2.xpose.msra.mxu0 0.0
    %380 = vmatprep.subr.mxu0 0.0
    %381 = vmatpush2.xpose.msra.mxu0 0.0
    %382 = vmatprep.subr.mxu0 0.0
    %383 = vmatpush2.xpose.msra.mxu0 0.0
    %384 = vmatprep.subr.mxu0 0.0
    %385 = vmatpush2.xpose.msra.mxu0 0.0
    %386 = vmatprep.subr.mxu0 0.0
    %387 = vmatpush2.xpose.msra.mxu0 0.0
    %388 = vmatprep.subr.mxu0 0.0
    %389 = vmatpush2.xpose.msra.mxu0 0.0
    %390 = vmatprep.subr.mxu0 0.0
    %391 = vmatpush2.xpose.msra.mxu0 0.0
    %392 = vmatprep.subr.mxu0 0.0
    %393 = vmatpush2.xpose.msra.mxu0 0.0
    %394 = vmatprep.subr.mxu0 0.0
    %395 = vmatpush2.xpose.msra.mxu0 0.0
    %396 = vmatprep.subr.mxu0 0.0
    %397 = vmatpush2.xpose.msra.mxu0 0.0
    %398 = vmatprep.subr.mxu0 0.0
    %399 = vmatpush2.xpose.msra.mxu0 0.0
    %400 = vmatprep.mubr.f32.mxu0 0.0
    %401 = vmatmul.mubr.f32.gmra.mxu0 %v164
    %v402 = vpop.f32.mrf.mxu0
    %v403 = vadd.f32 0.0, %v402
    %v404 = vpop.f32.mrf.mxu0
    %405 = vdwg.mxu0
    %v406 = vlaneseq
    %v407 = vshrl.u32 %v406, 7
    %v408 = vsub.s32 0, %v407
    %v409 = vrot.slane %v403, %v408
    %v410 = vadd.f32 %v332, %v409
    %v411 = vmul.f32 %v326, 2.0
    %v412 = vsub.f32 %v410, %v411
    %v413 = vmax.f32 %v412, 0.0
    %v414 = vadd.f32 %v413, 1e-08
    %v415 = vrsqrt.pop %v414
    %v416 = vmul.f32 %v414, %v415
    %vm417 = vcmp.eq.f32.partialorder %v414, inf
    %v418 = vsel %vm417, %v414, %v416
    %vm419 = vcmp.eq.f32.partialorder %v414, 0.0
    %v420 = vand.u32 %v414, 2147483648
    %v421 = vsel %vm419, %v420, %v418
    %vm422 = vcmask 64512
    %v423 = vsel %vm422, %v254, 0.0
    %424 = vadd.xlane.f32.xlu0 %v423
    %v425 = vpop.xlane.xlu0 %424
    %v426 = vrcp.pop 8.0
    %v427 = vmul.f32 %v425, %v426
    %v428 = vrot.slane %v423, 4
    %v429 = vadd.f32 %v423, %v428
    %v430 = vrot.slane %v429, 2
    %v431 = vadd.f32 %v429, %v430
    %v432 = vrot.slane %v431, 1
    %v433 = vadd.f32 %v431, %v432
    %v434 = vmul.f32 %v433, %v426
    %v435 = vsel %vm70, %v427, 0.0
    %436 = vadd.xlane.f32.xlu0 %v435
    %v437 = vpop.xlane.xlu0 %436
    %v438 = vrot.slane %v437, 4
    %v439 = vadd.f32 %v437, %v438
    %v440 = vrot.slane %v439, 2
    %v441 = vadd.f32 %v439, %v440
    %v442 = vrot.slane %v441, 1
    %v443 = vadd.f32 %v441, %v442
    %s444 = vtos %v443
    %v445 = vrcp.pop 8.0
    %s446 = vtos %v445
    %s447 = smul.f32 %s444, %s446
    %v448 = vsub.f32 %v254, %v434
    %v449 = vsub.f32 %v448, %v427
    %v450 = vstv %s447
    %v451 = vadd.f32 %v449, %v450
    %v452 = vsel %vm422, %v421, 0.0
    %453 = vadd.xlane.f32.xlu0 %v452
    %v454 = vpop.xlane.xlu0 %453
    %v455 = vmul.f32 %v454, %v426
    %v456 = vrot.slane %v452, 4
    %v457 = vadd.f32 %v452, %v456
    %v458 = vrot.slane %v457, 2
    %v459 = vadd.f32 %v457, %v458
    %v460 = vrot.slane %v459, 1
    %v461 = vadd.f32 %v459, %v460
    %v462 = vmul.f32 %v461, %v426
    %v463 = vsel %vm70, %v455, 0.0
    %464 = vadd.xlane.f32.xlu0 %v463
    %v465 = vpop.xlane.xlu0 %464
    %v466 = vrot.slane %v465, 4
    %v467 = vadd.f32 %v465, %v466
    %v468 = vrot.slane %v467, 2
    %v469 = vadd.f32 %v467, %v468
    %v470 = vrot.slane %v469, 1
    %v471 = vadd.f32 %v469, %v470
    %s472 = vtos %v471
    %v473 = vrcp.pop 8.0
    %s474 = vtos %v473
    %s475 = smul.f32 %s472, %s474
    %v476 = vsub.f32 %v421, %v462
    %v477 = vsub.f32 %v476, %v455
    %v478 = vstv %s475
    %v479 = vadd.f32 %v477, %v478
    %v480 = vmul.f32 %v451, %v479
    %v481 = vsel %vm422, %v480, 0.0
    %482 = vadd.xlane.f32.xlu0 %v481
    %v483 = vpop.xlane.xlu0 %482
    %v484 = vrot.slane %v483, 4
    %v485 = vadd.f32 %v483, %v484
    %v486 = vrot.slane %v485, 2
    %v487 = vadd.f32 %v485, %v486
    %v488 = vrot.slane %v487, 1
    %v489 = vadd.f32 %v487, %v488
    %s490 = vtos %v489
    %s491 = smul.f32 %s490, 0.015625
    %v492 = vmul.f32 %v451, %v451
    %v493 = vsel %vm422, %v492, 0.0
    %494 = vadd.xlane.f32.xlu0 %v493
    %v495 = vpop.xlane.xlu0 %494
    %v496 = vrot.slane %v495, 4
    %v497 = vadd.f32 %v495, %v496
    %v498 = vrot.slane %v497, 2
    %v499 = vadd.f32 %v497, %v498
    %v500 = vrot.slane %v499, 1
    %v501 = vadd.f32 %v499, %v500
    %s502 = vtos %v501
    %s503 = smul.f32 %s502, 0.015625
    %v504 = vmul.f32 %v479, %v479
    %v505 = vsel %vm422, %v504, 0.0
    %506 = vadd.xlane.f32.xlu0 %v505
    %v507 = vpop.xlane.xlu0 %506
    %v508 = vrot.slane %v507, 4
    %v509 = vadd.f32 %v507, %v508
    %v510 = vrot.slane %v509, 2
    %v511 = vadd.f32 %v509, %v510
    %v512 = vrot.slane %v511, 1
    %v513 = vadd.f32 %v511, %v512
    %s514 = vtos %v513
    %s515 = smul.f32 %s514, 0.015625
    %s516 = smul.f32 %s503, %s515
    %s517 = sadd.f32 %s516, 1e-08
    %v518 = vstv %s517
    %v519 = vrsqrt.pop %v518
    %s520 = vtos %v519
    %s521 = smul.f32 %s491, %s520
    %s522 = ssub.f32 1.0, %s521
    %s523 = sadd.f32 %s83, %s522
    %vm524 = vcmp.eq.s32.totalorder %v58, 0
    %vm525 = vcmp.eq.s32.totalorder %v58, 1
    %vm526 = vcmp.eq.s32.totalorder %v58, 2
    %v527 = vstv %s522
    %v528 = vsel %vm526, %v527, 0.0
    %v529 = vstv %s83
    %v530 = vsel %vm525, %v529, %v528
    %v531 = vstv %s523
    %v532 = vsel %vm524, %v531, %v530
    %533 = vst [vmem:[#allocation7] sm:$0x1] %v532
    // Predicated region
    $region26: #{tpu_custom_call.1} parent=1 // pred_check
      _
    $region27: #{tpu_custom_call.1} parent=1 // pred_check_branch
      %535 = sbr.rel (0) target = $region29
    $region28: #{tpu_custom_call.1} parent=1 // pred_region
      %s537 = ssub.s32 16, 16
      %538 = vsyncadd [#allocation4], %s537
      %s540 = sshll.u32 [#allocation7], 4
      %s541 = int_to_ptr.vmem [resolvable:$true] %s540
      %543 = dma.vmem_to_hbm [thread:$0]  %s541, 16, %s4, [#allocation4]
    $region29: #{tpu_custom_call.1} parent=1 // pred_fallthru
      _
    // Predicated region
    $region30: #{tpu_custom_call.1} parent=1 // pred_check
      _
    $region31: #{tpu_custom_call.1} parent=1 // pred_check_branch
      %545 = sbr.rel (0) target = $region33
    $region32: #{tpu_custom_call.1} parent=1 // pred_region
      %546 = dma.done [#allocation4], 16
    $region33: #{tpu_custom_call.1} parent=1 // pred_fallthru
      _
    %547 = vsyncpa [#allocation3], 1
    %548 = vsyncpa [#allocation6], 1
    %549 = vsyncpa [#allocation4], 1

</llo_original>
